<compile_context>
chip_gen: v7x
topology: tpu7x:2x2x1
jax: 0.10.0
libtpu: 0.0.40
codegen_flags: <defaults>
</compile_context>

<pallas_src>
import jax
import jax.numpy as jnp
from jax.experimental import pallas as pl
from jax.experimental.pallas import tpu as pltpu


def _round_up(a, b):
    return (a + b - 1) // b * b


def _wxb_kernel(w_ref, x_ref, b_ref, o_ref):
    # Single contraction tile: one MXU matmul + lane-broadcast bias add.
    # w_ref: (COUTp, KCp)   bf16
    # x_ref: (1, KCp, TP)   bf16
    # b_ref: (COUTp, 1)     f32
    # o_ref: (1, COUTp, TP) f32
    o_ref[0] = jnp.dot(w_ref[...], x_ref[0],
                       preferred_element_type=jnp.float32) + b_ref[...]


def _wxb_kernel_ktiled(w_ref, x_ref, b_ref, o_ref):
    # Contraction split over the innermost "arbitrary" k axis; the f32 output block is
    # resident across k (out index_map ignores k) and doubles as the accumulator.
    k = pl.program_id(2)

    @pl.when(k == 0)
    def _init():
        o_ref[0] = jnp.broadcast_to(b_ref[...], o_ref.shape[1:])

    o_ref[0] += jnp.dot(w_ref[...], x_ref[0],
                        preferred_element_type=jnp.float32)


def basic_conv3d(x_ncdhw, weight_oidhw, bias, kernel_size, *, tp_cap=2048):
    """BasicConv3D forward: ConstantPad3d(k//2) + Conv3d(padding=0) + bias.  NCDHW in/out."""
    N, Cin, D, H, W = x_ncdhw.shape
    Cout = weight_oidhw.shape[0]
    K = int(kernel_size)
    p = K // 2 if K >= 2 else 0
    # Output extent correct for odd AND even K (even K yields D + 1, etc.).
    Do = D + 2 * p - K + 1
    Ho = H + 2 * p - K + 1
    Wo = W + 2 * p - K + 1
    P = Do * Ho * Wo
    KC = K * K * K * Cin

    # ---- tile geometry --------------------------------------------------------------
    COUTp = _round_up(Cout, 8)            # f32 sublane multiple, NOT 128 lanes
    KCp = _round_up(KC, 128)              # contraction padded to a lane multiple
    if KCp <= 512:
        TK = KCp                          # single contraction tile (common case)
    else:
        TK = 128                          # largest 128-multiple divisor of KCp <= 512
        for cand in (512, 384, 256, 128):
            if KCp % cand == 0:
                TK = cand
                break
    P_pad = _round_up(P, 128)
    if P_pad <= tp_cap:
        TP = P_pad                        # one lane-dense row tile per batch element
    else:
        TP = tp_cap
        P_pad = _round_up(P_pad, TP)

    # ---- wrapper glue (XLA): bf16 cast once, pad, im2col straight from NCDHW ---------
    xb = x_ncdhw.astype(jnp.bfloat16)
    xp = jnp.pad(xb, ((0, 0), (0, 0), (p, p), (p, p), (p, p)))     # ConstantPad3d(k//2)
    taps = [xp[:, :, kd:kd + Do, kh:kh + Ho, kw:kw + Wo]
            for kd in range(K) for kh in range(K) for kw in range(K)]
    slab = jnp.stack(taps, axis=1)                                 # (N, K^3, Cin, Do,Ho,Wo)
    slab = slab.reshape(N, KC, P)
    slab = jnp.pad(slab, ((0, 0), (0, KCp - KC), (0, P_pad - P)))

    # (Cout,Cin,Kd,Kh,Kw) -> (Cout,Kd,Kh,Kw,Cin) -> (Cout, KC), zero-padded, bf16.
    w2 = jnp.transpose(weight_oidhw, (0, 2, 3, 4, 1)).reshape(Cout, KC)
    w2 = jnp.pad(w2.astype(jnp.bfloat16), ((0, COUTp - Cout), (0, KCp - KC)))
    b2 = jnp.pad(bias.astype(jnp.float32).reshape(Cout, 1),
                 ((0, COUTp - Cout), (0, 0)))

    n_rows = P_pad // TP
    n_k = KCp // TK

    if n_k == 1:
        grid = (N, n_rows)
        kernel = _wxb_kernel
        in_specs = [
            pl.BlockSpec((COUTp, KCp), lambda n, m: (0, 0)),
            pl.BlockSpec((1, KCp, TP), lambda n, m: (n, 0, m)),
            pl.BlockSpec((COUTp, 1), lambda n, m: (0, 0)),
        ]
        out_specs = pl.BlockSpec((1, COUTp, TP), lambda n, m: (n, 0, m))
        dims = ("parallel", "parallel")
    else:
        grid = (N, n_rows, n_k)
        kernel = _wxb_kernel_ktiled
        in_specs = [
            pl.BlockSpec((COUTp, TK), lambda n, m, k: (0, k)),
            pl.BlockSpec((1, TK, TP), lambda n, m, k: (n, k, m)),
            pl.BlockSpec((COUTp, 1), lambda n, m, k: (0, 0)),
        ]
        out_specs = pl.BlockSpec((1, COUTp, TP), lambda n, m, k: (n, 0, m))
        dims = ("parallel", "parallel", "arbitrary")

    out = pl.pallas_call(
        kernel,
        out_shape=jax.ShapeDtypeStruct((N, COUTp, P_pad), jnp.float32),
        grid_spec=pltpu.PrefetchScalarGridSpec(
            num_scalar_prefetch=0,
            grid=grid,
            in_specs=in_specs,
            out_specs=out_specs,
        ),
        compiler_params=pltpu.CompilerParams(
            dimension_semantics=dims,
            vmem_limit_bytes=32 * 1024 * 1024,   # safe on v5e/v6e/v7x for these tiles
        ),
    )(w2, slab, b2)

    # Free reshape back to NCDHW (no transpose needed in this formulation).
    return out[:, :Cout, :P].reshape(N, Cout, Do, Ho, Wo)


if __name__ == "__main__":
    # Small shapes consistent with the module: batch=2, in_ch=4, out_ch=8,
    # spatial D=H=W=8, kernel_size=3 (bias='auto' -> True, bn=False, act=False).
    N, Cin, Cout, D, H, W, K = 2, 4, 8, 8, 8, 8, 3

    key = jax.random.PRNGKey(0)
    kx, kw, kb = jax.random.split(key, 3)
    x = jax.random.normal(kx, (N, Cin, D, H, W), dtype=jnp.float32)
    weight = jax.random.normal(kw, (Cout, Cin, K, K, K), dtype=jnp.float32) * 0.1
    bias = jax.random.normal(kb, (Cout,), dtype=jnp.float32) * 0.1

    out = basic_conv3d(x, weight, bias, K)
    out = jax.block_until_ready(out)

    # Reference with identical operand precision (bf16 operands, f32 accumulation),
    # matching PyTorch Conv3d semantics: ConstantPad3d(k//2) + Conv3d(padding=0) + bias.
    ref = jax.lax.conv_general_dilated(
        x.astype(jnp.bfloat16), weight.astype(jnp.bfloat16),
        window_strides=(1, 1, 1),
        padding=[(K // 2, K // 2)] * 3,
        dimension_numbers=("NCDHW", "OIDHW", "NCDHW"),
        preferred_element_type=jnp.float32,
    ) + bias[None, :, None, None, None]

    assert out.shape == (N, Cout, D, H, W)
    assert jnp.max(jnp.abs(out - ref)) < 1e-3

    print("KERNEL_OK")
</pallas_src>

<mosaic_0001>
module attributes {stable_mosaic.version = 11 : i64} {
  func.func @_wxb_kernel(%arg0: i32, %arg1: i32, %arg2: memref<8x128xbf16, #tpu.memory_space<vmem>>, %arg3: memref<1x128x512xbf16, #tpu.memory_space<vmem>>, %arg4: memref<8x1xf32, #tpu.memory_space<vmem>>, %arg5: memref<1x8x512xf32, #tpu.memory_space<vmem>>) attributes {dimension_semantics = [#tpu.dimension_semantics<parallel>, #tpu.dimension_semantics<parallel>], iteration_bounds = array<i64: 2, 1>, scalar_prefetch = 0 : i64, scratch_operands = 0 : i64, tpu.core_type = #tpu.core_type<tc>, window_params = [{pipeline_mode = #tpu.pipeline_mode<synchronous>, transform_indices = @transform_0, window_bounds = array<i64: 8, 128>}, {transform_indices = @transform_1, window_bounds = array<i64: 1, 128, 512>}, {pipeline_mode = #tpu.pipeline_mode<synchronous>, transform_indices = @transform_2, window_bounds = array<i64: 8, 1>}, {transform_indices = @transform_3, window_bounds = array<i64: 1, 8, 512>}]} {
    %c0 = arith.constant 0 : index
    %c0_0 = arith.constant 0 : index
    %0 = vector.load %arg2[%c0, %c0_0] : memref<8x128xbf16, #tpu.memory_space<vmem>>, vector<8x128xbf16>
    %c0_1 = arith.constant 0 : index
    %c0_2 = arith.constant 0 : index
    %c0_3 = arith.constant 0 : index
    %1 = vector.load %arg3[%c0_1, %c0_2, %c0_3] : memref<1x128x512xbf16, #tpu.memory_space<vmem>>, vector<1x128x512xbf16>
    %2 = vector.shape_cast %1 : vector<1x128x512xbf16> to vector<128x512xbf16>
    %cst = arith.constant dense<0.000000e+00> : vector<8x512xf32>
    %3 = tpu.matmul %0, %2, %cst {dimension_numbers = #tpu.dot_dimension_numbers<[1], [0], [0], [1], [0, 0, 1, 1], [], []>} : vector<8x128xbf16>, vector<128x512xbf16>, vector<8x512xf32> -> vector<8x512xf32>
    %c0_4 = arith.constant 0 : index
    %c0_5 = arith.constant 0 : index
    %4 = vector.load %arg4[%c0_4, %c0_5] : memref<8x1xf32, #tpu.memory_space<vmem>>, vector<8x1xf32>
    %5 = vector.broadcast %4 : vector<8x1xf32> to vector<8x512xf32>
    %6 = arith.addf %3, %5 : vector<8x512xf32>
    %c0_6 = arith.constant 0 : index
    %c0_7 = arith.constant 0 : index
    %c0_8 = arith.constant 0 : index
    %7 = vector.load %arg5[%c0_6, %c0_7, %c0_8] : memref<1x8x512xf32, #tpu.memory_space<vmem>>, vector<1x8x512xf32>
    %8 = vector.shape_cast %7 : vector<1x8x512xf32> to vector<8x512xf32>
    %9 = vector.shape_cast %6 : vector<8x512xf32> to vector<1x8x512xf32>
    tpu.vector_store %arg5[%c0_6, %c0_7, %c0_8], %9 {strides = array<i32>} : memref<1x8x512xf32, #tpu.memory_space<vmem>>, vector<1x8x512xf32>,
    return
  }
  func.func @transform_0(%arg0: i32, %arg1: i32) -> (i32, i32) {
    %c0_i32 = arith.constant 0 : i32
    %c0_i32_0 = arith.constant 0 : i32
    %c0_i32_1 = arith.constant 0 : i32
    return %c0_i32, %c0_i32_0 : i32, i32
  }
  func.func @transform_1(%arg0: i32, %arg1: i32) -> (i32, i32, i32) {
    %c0_i32 = arith.constant 0 : i32
    %c0_i32_0 = arith.constant 0 : i32
    return %arg0, %c0_i32, %arg1 : i32, i32, i32
  }
  func.func @transform_2(%arg0: i32, %arg1: i32) -> (i32, i32) {
    %c0_i32 = arith.constant 0 : i32
    %c0_i32_0 = arith.constant 0 : i32
    %c0_i32_1 = arith.constant 0 : i32
    return %c0_i32, %c0_i32_0 : i32, i32
  }
  func.func @transform_3(%arg0: i32, %arg1: i32) -> (i32, i32, i32) {
    %c0_i32 = arith.constant 0 : i32
    %c0_i32_0 = arith.constant 0 : i32
    return %arg0, %c0_i32, %arg1 : i32, i32, i32
  }
}

</mosaic_0001>

<llo_original>
// kernel: tpu_custom_call.1
$region0: #{tpu_custom_call.1}
  #allocation0 [shape = 'u32[]', space=smem, size = 0x4, offset = 0x4, fixed_abs, tag = 'smem constant byte address 0x4 - core index']
  #allocation1 [shape = 'u32[144,128]{1,0:T(1,128)}', space=vmem, size = 0x12000, scoped, tag = 'internal scratch']
  %s0 = inlined_call_operand.vmem [shape: bf16[8,128], index: 0, kind: input, shape index: {}]
  %s1 = inlined_call_operand.hbm [shape: bf16[2,128,512], index: 1, kind: input, shape index: {}]
  %s2 = inlined_call_operand.vmem [shape: f32[8,1], index: 2, kind: input, shape index: {}]
  %s3 = inlined_call_operand.hbm [shape: f32[2,8,512], index: 3, kind: output, shape index: {}]
  %s4 = sld [smem:[#allocation0]]
  $region49: #{tpu_custom_call.1} parent=0
    _
  %s6 = ssub.s32 1, %s4
  %s7 = scalar_select 0, %s6, %s4
  $region1: #{tpu_custom_call.1} parent=0
    #allocation2 [shape = 'u8[262144]{0}', space=vmem, size = 0x40000, scoped, tag = 'input window, operand 1']
    #allocation3 [shape = 's32[2]{0}', space=sflag, size = 0x8, scoped, tag = 'scoped memory for tpu_custom_call.1']
    #allocation4 [shape = 's32[2]{0}', space=sflag, size = 0x8, scoped, tag = 'scoped memory for tpu_custom_call.1']
    #allocation5 [shape = 'u8[32768]{0}', space=vmem, size = 0x8000, scoped, tag = 'output window, operand 0']
    %8 = vsyncpa [#allocation3], 0
    %s9 = scalar_lea.sflag [#allocation3], 1
    %10 = vsyncpa %s9, 0
    %11 = vsyncpa [#allocation4], 0
    %s12 = scalar_lea.sflag [#allocation4], 1
    %13 = vsyncpa %s12, 0
    loop: start=0, step=1, limit=4
    $region2: #{tpu_custom_call.1} parent=1 // loop_pre_header
      _
    $region3: #{tpu_custom_call.1} parent=1 // loop_header
      %s15 = sphi 0, %s19
      %p16 = scmp.ge.s32.totalorder %s15, 4
      %s22 = sphi 0, %s34
      %s23 = sphi 0, %s30
      %s24 = sphi 0, %s22
      %s25 = sphi 0, %s23
      %s26 = sphi 0, %s24
      %s27 = sphi 0, %s25
      %s35 = sphi 0, %s35
      %s37 = sphi 0, %s35
      %s38 = sphi 0, %s37
      %s52 = sphi 0, %s38
      %s60 = sphi 0, %s62
      %s63 = sphi 0, %s60
      %s64 = sphi 0, %s63
      %s80 = sphi 0, %s64
      %s84 = sphi 0, %s84
      %s86 = sphi 0, %s84
      %s87 = sphi 0, %s86
      %s101 = sphi 0, %s87
      %s109 = sphi 0, %s111
      %s112 = sphi 0, %s109
      %s113 = sphi 0, %s112
      %s129 = sphi 0, %s113
    $region4: #{tpu_custom_call.1} parent=1 // loop_header_branch
      %18 = sbr.rel (%p16) target = $region8
    $region5: #{tpu_custom_call.1} parent=1 // loop_body
      %s20 = ssub.s32 %s15, 1
      %s21 = ssub.s32 %s15, 2
      %s28 = sadd.s32 1, %s23
      %p29 = scmp.ge.s32.totalorder %s28, 1
      %s30 = scalar_select %p29, 0, %s28
      %s31 = sadd.s32 1, %s22
      %s32 = scalar_select %p29, %s31, %s22
      %p33 = scmp.ge.s32.totalorder %s32, 2
      %s34 = scalar_select %p33, 0, %s32
      %s36 = sadd.s32 %s35, 1
      %p39 = scmp.eq.s32.totalorder %s15, 1
      %p40 = scmp.ne.s32.totalorder %s35, %s37
      %p41 = scmp.eq.s32.totalorder %s15, 0
      %p42 = por %p40, %p41
      %p43 = scmp.ne.s32.totalorder %s35, %s37
      %p44 = scmp.eq.s32.totalorder %s20, 1
      %p45 = por %p43, %p44
      %p46 = scmp.ne.s32.totalorder %s37, %s38
      %p47 = scmp.eq.s32.totalorder %s20, 0
      %p48 = por %p46, %p47
      %p49 = scmp.ne.s32.totalorder %s37, %s38
      %p50 = scmp.eq.s32.totalorder %s21, 1
      %p51 = por %p49, %p50
      %p53 = scmp.ne.s32.totalorder %s38, %s52
      %p54 = scmp.eq.s32.totalorder %s21, 0
      %p55 = por %p53, %p54
      %s56 = ssub.s32 %s22, %s34
      %s57 = ssub.s32 %s23, %s30
      %s58 = sor.u32 %s56, %s57
      %p59 = scmp.eq.s32.totalorder %s58, 0
      %s61 = sadd.s32 %s60, 1
      %s62 = scalar_select %p59, %s60, %s61
      %p65 = pneg %p59
      %p66 = scmp.eq.s32.totalorder %s15, 1
      %p67 = por %p65, %p66
      %p68 = scmp.ne.s32.totalorder %s60, %s63
      %p69 = scmp.eq.s32.totalorder %s15, 0
      %p70 = por %p68, %p69
      %p71 = scmp.ne.s32.totalorder %s60, %s63
      %p72 = scmp.eq.s32.totalorder %s20, 1
      %p73 = por %p71, %p72
      %p74 = scmp.ne.s32.totalorder %s63, %s64
      %p75 = scmp.eq.s32.totalorder %s20, 0
      %p76 = por %p74, %p75
      %p77 = scmp.ne.s32.totalorder %s63, %s64
      %p78 = scmp.eq.s32.totalorder %s21, 1
      %p79 = por %p77, %p78
      %p81 = scmp.ne.s32.totalorder %s64, %s80
      %p82 = scmp.eq.s32.totalorder %s21, 0
      %p83 = por %p81, %p82
      %s85 = sadd.s32 %s84, 1
      %p88 = scmp.eq.s32.totalorder %s15, 1
      %p89 = scmp.ne.s32.totalorder %s84, %s86
      %p90 = scmp.eq.s32.totalorder %s15, 0
      %p91 = por %p89, %p90
      %p92 = scmp.ne.s32.totalorder %s84, %s86
      %p93 = scmp.eq.s32.totalorder %s20, 1
      %p94 = por %p92, %p93
      %p95 = scmp.ne.s32.totalorder %s86, %s87
      %p96 = scmp.eq.s32.totalorder %s20, 0
      %p97 = por %p95, %p96
      %p98 = scmp.ne.s32.totalorder %s86, %s87
      %p99 = scmp.eq.s32.totalorder %s21, 1
      %p100 = por %p98, %p99
      %p102 = scmp.ne.s32.totalorder %s87, %s101
      %p103 = scmp.eq.s32.totalorder %s21, 0
      %p104 = por %p102, %p103
      %s105 = ssub.s32 %s22, %s34
      %s106 = ssub.s32 %s23, %s30
      %s107 = sor.u32 %s105, %s106
      %p108 = scmp.eq.s32.totalorder %s107, 0
      %s110 = sadd.s32 %s109, 1
      %s111 = scalar_select %p108, %s109, %s110
      %p114 = pneg %p108
      %p115 = scmp.eq.s32.totalorder %s15, 1
      %p116 = por %p114, %p115
      %p117 = scmp.ne.s32.totalorder %s109, %s112
      %p118 = scmp.eq.s32.totalorder %s15, 0
      %p119 = por %p117, %p118
      %p120 = scmp.ne.s32.totalorder %s109, %s112
      %p121 = scmp.eq.s32.totalorder %s20, 1
      %p122 = por %p120, %p121
      %p123 = scmp.ne.s32.totalorder %s112, %s113
      %p124 = scmp.eq.s32.totalorder %s20, 0
      %p125 = por %p123, %p124
      %p126 = scmp.ne.s32.totalorder %s112, %s113
      %p127 = scmp.eq.s32.totalorder %s21, 1
      %p128 = por %p126, %p127
      %p130 = scmp.ne.s32.totalorder %s113, %s129
      %p131 = scmp.eq.s32.totalorder %s21, 0
      %p132 = por %p130, %p131
      %p133 = scmp.le.s32.totalorder 1, %s15
      %p134 = scmp.lt.s32.totalorder %s15, 3
      %p135 = pnand %p133, %p134
      %p136 = pneg %p135
      // Predicated region
      $region9: #{tpu_custom_call.1} parent=5 // pred_check
        _
      $region10: #{tpu_custom_call.1} parent=5 // pred_check_branch
        %138 = sbr.rel (%p135) target = $region12
      $region11: #{tpu_custom_call.1} parent=5 // pred_region
        %s139 = ssub.s32 %s15, 1
        // Predicated region
        $region13: #{tpu_custom_call.1} parent=11 // pred_check
          %p140 = pneg %p48
        $region14: #{tpu_custom_call.1} parent=11 // pred_check_branch
          %142 = sbr.rel (%p140) target = $region16
        $region15: #{tpu_custom_call.1} parent=11 // pred_region
          _
        $region16: #{tpu_custom_call.1} parent=11 // pred_fallthru
          _
        // Predicated region
        $region17: #{tpu_custom_call.1} parent=11 // pred_check
          %p143 = pneg %p97
        $region18: #{tpu_custom_call.1} parent=11 // pred_check_branch
          %145 = sbr.rel (%p143) target = $region20
        $region19: #{tpu_custom_call.1} parent=11 // pred_region
          _
        $region20: #{tpu_custom_call.1} parent=11 // pred_fallthru
          _
      $region12: #{tpu_custom_call.1} parent=5 // pred_fallthru
        _
      %p146 = scmp.lt.s32.totalorder %s15, 2
      // Predicated region
      $region21: #{tpu_custom_call.1} parent=5 // pred_check
        %p147 = pneg %p146
      $region22: #{tpu_custom_call.1} parent=5 // pred_check_branch
        %149 = sbr.rel (%p147) target = $region24
      $region23: #{tpu_custom_call.1} parent=5 // pred_region
        // Predicated region
        $region25: #{tpu_custom_call.1} parent=23 // pred_check
          %p150 = pneg %p70
        $region26: #{tpu_custom_call.1} parent=23 // pred_check_branch
          %152 = sbr.rel (%p150) target = $region28
        $region27: #{tpu_custom_call.1} parent=23 // pred_region
          %s153 = sand.u32 %s60, 1
          %s154 = scalar_lea.sflag [#allocation3], %s153
          %s155 = sand.u32 %s60, 1
          %s156 = smul.addr %s155, 256
          %s157 = scalar_lea.vmem [#allocation2], %s156
          %s158 = smul.u32 4, %s23
          %s160 = ssub.s32 4096, 4096
          %161 = vsyncadd %s154, %s160
          %s162 = smul.addr %s22, 64
          %s163 = sadd.s32 %s158, %s162
          %s164 = smul.addr %s163, 64
          %s165 = scalar_lea.hbm %s1, %s164
          %s166 = sshll.u32 %s157, 4
          %s167 = int_to_ptr.vmem [resolvable:$true] %s166
          %172 = dma.hbm_to_vmem [thread:$0]  %s165, 4096, %s167, %s154, 256, 256, 16
        $region28: #{tpu_custom_call.1} parent=23 // pred_fallthru
          _
      $region24: #{tpu_custom_call.1} parent=5 // pred_fallthru
        _
      %p173 = scmp.le.s32.totalorder 1, %s15
      %p174 = scmp.lt.s32.totalorder %s15, 3
      %p175 = pnand %p173, %p174
      %p176 = pneg %p175
      // Predicated region
      $region29: #{tpu_custom_call.1} parent=5 // pred_check
        _
      $region30: #{tpu_custom_call.1} parent=5 // pred_check_branch
        %178 = sbr.rel (%p175) target = $region32
      $region31: #{tpu_custom_call.1} parent=5 // pred_region
        %s179 = ssub.s32 %s15, 1
        %s180 = sand.u32 %s63, 1
        %s181 = scalar_lea.sflag [#allocation3], %s180
        %s182 = sand.u32 %s63, 1
        %s183 = smul.addr %s182, 256
        %s184 = scalar_lea.vmem [#allocation2], %s183
        // Predicated region
        $region33: #{tpu_custom_call.1} parent=31 // pred_check
          %p185 = pneg %p76
        $region34: #{tpu_custom_call.1} parent=31 // pred_check_branch
          %187 = sbr.rel (%p185) target = $region36
        $region35: #{tpu_custom_call.1} parent=31 // pred_region
          %188 = dma.done %s181, 4096
        $region36: #{tpu_custom_call.1} parent=31 // pred_fallthru
          _
        %p189 = pneg %p48
        %p190 = pneg %p45
        %s191 = sand.u32 %s63, 1
        %s192 = scalar_lea.sflag [#allocation3], %s191
        %s193 = sand.u32 %s63, 1
        %s194 = smul.addr %s193, 256
        %s195 = scalar_lea.vmem [#allocation2], %s194
        %p196 = pneg %p76
        %p197 = pneg %p73
        %p198 = pneg %p97
        %p199 = pneg %p94
        %p200 = pneg %p125
        %p201 = pneg %p122
        %s202 = sand.u32 %s112, 1
        %s203 = scalar_lea.sflag [#allocation4], %s202
        %s204 = sand.u32 %s112, 1
        %s205 = smul.addr %s204, 32
        %s206 = scalar_lea.vmem [#allocation5], %s205
        %s207 = smul.u32 4, %s25
        %s208 = smul.u32 4, %s25
        %v210 = vld [vmem:[%s0] sm:$0xf]
        %v211 = vld [vmem:[%s184] sm:$0xff]
        %v212 = vld [vmem:[%s184 + $0x8] sm:$0xff]
        %v213 = vld [vmem:[%s184 + $0x10] sm:$0xff]
        %v214 = vld [vmem:[%s184 + $0x18] sm:$0xff]
        %v215 = vld [vmem:[%s184 + $0x20] sm:$0xff]
        %v216 = vld [vmem:[%s184 + $0x28] sm:$0xff]
        %v217 = vld [vmem:[%s184 + $0x30] sm:$0xff]
        %v218 = vld [vmem:[%s184 + $0x38] sm:$0xff]
        %v219 = vld [vmem:[%s184 + $0x40] sm:$0xff]
        %v220 = vld [vmem:[%s184 + $0x48] sm:$0xff]
        %v221 = vld [vmem:[%s184 + $0x50] sm:$0xff]
        %v222 = vld [vmem:[%s184 + $0x58] sm:$0xff]
        %v223 = vld [vmem:[%s184 + $0x60] sm:$0xff]
        %v224 = vld [vmem:[%s184 + $0x68] sm:$0xff]
        %v225 = vld [vmem:[%s184 + $0x70] sm:$0xff]
        %v226 = vld [vmem:[%s184 + $0x78] sm:$0xff]
        %v227 = vld [vmem:[%s184 + $0x80] sm:$0xff]
        %v228 = vld [vmem:[%s184 + $0x88] sm:$0xff]
        %v229 = vld [vmem:[%s184 + $0x90] sm:$0xff]
        %v230 = vld [vmem:[%s184 + $0x98] sm:$0xff]
        %v231 = vld [vmem:[%s184 + $0xa0] sm:$0xff]
        %v232 = vld [vmem:[%s184 + $0xa8] sm:$0xff]
        %v233 = vld [vmem:[%s184 + $0xb0] sm:$0xff]
        %v234 = vld [vmem:[%s184 + $0xb8] sm:$0xff]
        %v235 = vld [vmem:[%s184 + $0xc0] sm:$0xff]
        %v236 = vld [vmem:[%s184 + $0xc8] sm:$0xff]
        %v237 = vld [vmem:[%s184 + $0xd0] sm:$0xff]
        %v238 = vld [vmem:[%s184 + $0xd8] sm:$0xff]
        %v239 = vld [vmem:[%s184 + $0xe0] sm:$0xff]
        %v240 = vld [vmem:[%s184 + $0xe8] sm:$0xff]
        %v241 = vld [vmem:[%s184 + $0xf0] sm:$0xff]
        %v242 = vld [vmem:[%s184 + $0xf8] sm:$0xff]
        %v243 = vld [vmem:[%s2] sm:$0xff]
        %245 = vset.pattern.permute.xlu0 0
        %246 = vperm.xlu0 %245, %v243
        %v247 = vpop.permute.xlu0 %246
        %v281 = vunpack.c.l.b16 %v211
        %v282 = vunpack.c.h.b16 %v211
        %v283 = vunpack.c.l.b16 %v212
        %v284 = vunpack.c.h.b16 %v212
        %v285 = vunpack.c.l.b16 %v213
        %v286 = vunpack.c.h.b16 %v213
        %v287 = vunpack.c.l.b16 %v214
        %v288 = vunpack.c.h.b16 %v214
        %v289 = vunpack.c.l.b16 %v215
        %v290 = vunpack.c.h.b16 %v215
        %v291 = vunpack.c.l.b16 %v216
        %v292 = vunpack.c.h.b16 %v216
        %v293 = vunpack.c.l.b16 %v217
        %v294 = vunpack.c.h.b16 %v217
        %v295 = vunpack.c.l.b16 %v218
        %v296 = vunpack.c.h.b16 %v218
        %v297 = vunpack.c.l.b16 %v219
        %v298 = vunpack.c.h.b16 %v219
        %v299 = vunpack.c.l.b16 %v220
        %v300 = vunpack.c.h.b16 %v220
        %v301 = vunpack.c.l.b16 %v221
        %v302 = vunpack.c.h.b16 %v221
        %v303 = vunpack.c.l.b16 %v222
        %v304 = vunpack.c.h.b16 %v222
        %v305 = vunpack.c.l.b16 %v223
        %v306 = vunpack.c.h.b16 %v223
        %v307 = vunpack.c.l.b16 %v224
        %v308 = vunpack.c.h.b16 %v224
        %v309 = vunpack.c.l.b16 %v225
        %v310 = vunpack.c.h.b16 %v225
        %v311 = vunpack.c.l.b16 %v226
        %v312 = vunpack.c.h.b16 %v226
        %v313 = vunpack.c.l.b16 %v227
        %v314 = vunpack.c.h.b16 %v227
        %v315 = vunpack.c.l.b16 %v228
        %v316 = vunpack.c.h.b16 %v228
        %v317 = vunpack.c.l.b16 %v229
        %v318 = vunpack.c.h.b16 %v229
        %v319 = vunpack.c.l.b16 %v230
        %v320 = vunpack.c.h.b16 %v230
        %v321 = vunpack.c.l.b16 %v231
        %v322 = vunpack.c.h.b16 %v231
        %v323 = vunpack.c.l.b16 %v232
        %v324 = vunpack.c.h.b16 %v232
        %v325 = vunpack.c.l.b16 %v233
        %v326 = vunpack.c.h.b16 %v233
        %v327 = vunpack.c.l.b16 %v234
        %v328 = vunpack.c.h.b16 %v234
        %v329 = vunpack.c.l.b16 %v235
        %v330 = vunpack.c.h.b16 %v235
        %v331 = vunpack.c.l.b16 %v236
        %v332 = vunpack.c.h.b16 %v236
        %v333 = vunpack.c.l.b16 %v237
        %v334 = vunpack.c.h.b16 %v237
        %v335 = vunpack.c.l.b16 %v238
        %v336 = vunpack.c.h.b16 %v238
        %v337 = vunpack.c.l.b16 %v239
        %v338 = vunpack.c.h.b16 %v239
        %v339 = vunpack.c.l.b16 %v240
        %v340 = vunpack.c.h.b16 %v240
        %v341 = vunpack.c.l.b16 %v241
        %v342 = vunpack.c.h.b16 %v241
        %v343 = vunpack.c.l.b16 %v242
        %v344 = vunpack.c.h.b16 %v242
        %v345 = vpack.c.b16 %v285, %v281
        %v346 = vpack.c.b16 %v286, %v282
        %v347 = vpack.c.b16 %v287, %v283
        %v348 = vpack.c.b16 %v288, %v284
        %v349 = vpack.c.b16 %v293, %v289
        %v350 = vpack.c.b16 %v294, %v290
        %v351 = vpack.c.b16 %v295, %v291
        %v352 = vpack.c.b16 %v296, %v292
        %v353 = vpack.c.b16 %v301, %v297
        %v354 = vpack.c.b16 %v302, %v298
        %v355 = vpack.c.b16 %v303, %v299
        %v356 = vpack.c.b16 %v304, %v300
        %v357 = vpack.c.b16 %v309, %v305
        %v358 = vpack.c.b16 %v310, %v306
        %v359 = vpack.c.b16 %v311, %v307
        %v360 = vpack.c.b16 %v312, %v308
        %v361 = vpack.c.b16 %v317, %v313
        %v362 = vpack.c.b16 %v318, %v314
        %v363 = vpack.c.b16 %v319, %v315
        %v364 = vpack.c.b16 %v320, %v316
        %v365 = vpack.c.b16 %v325, %v321
        %v366 = vpack.c.b16 %v326, %v322
        %v367 = vpack.c.b16 %v327, %v323
        %v368 = vpack.c.b16 %v328, %v324
        %v369 = vpack.c.b16 %v333, %v329
        %v370 = vpack.c.b16 %v334, %v330
        %v371 = vpack.c.b16 %v335, %v331
        %v372 = vpack.c.b16 %v336, %v332
        %v373 = vpack.c.b16 %v341, %v337
        %v374 = vpack.c.b16 %v342, %v338
        %v375 = vpack.c.b16 %v343, %v339
        %v376 = vpack.c.b16 %v344, %v340
        %409 = vmatprep.subr.bf16.mxu0 %v346
        %410 = vmatpush1.bf16.msra.mxu0 %v345
        %411 = vmatprep.subr.bf16.mxu0 %v350
        %412 = vmatpush1.bf16.msra.mxu0 %v349
        %413 = vmatprep.subr.bf16.mxu0 %v354
        %414 = vmatpush1.bf16.msra.mxu0 %v353
        %415 = vmatprep.subr.bf16.mxu0 %v358
        %416 = vmatpush1.bf16.msra.mxu0 %v357
        %417 = vmatprep.subr.bf16.mxu0 %v362
        %418 = vmatpush1.bf16.msra.mxu0 %v361
        %419 = vmatprep.subr.bf16.mxu0 %v366
        %420 = vmatpush1.bf16.msra.mxu0 %v365
        %421 = vmatprep.subr.bf16.mxu0 %v370
        %422 = vmatpush1.bf16.msra.mxu0 %v369
        %423 = vmatprep.subr.bf16.mxu0 %v374
        %424 = vmatpush1.bf16.msra.mxu0 %v373
        %425 = vmatprep.subr.bf16.mxu0 0
        %426 = vmatpush1.bf16.msra.mxu0 0
        %427 = vmatprep.subr.bf16.mxu0 0
        %428 = vmatpush1.bf16.msra.mxu0 0
        %429 = vmatprep.subr.bf16.mxu0 0
        %430 = vmatpush1.bf16.msra.mxu0 0
        %431 = vmatprep.subr.bf16.mxu0 0
        %432 = vmatpush1.bf16.msra.mxu0 0
        %433 = vmatprep.subr.bf16.mxu0 0
        %434 = vmatpush1.bf16.msra.mxu0 0
        %435 = vmatprep.subr.bf16.mxu0 0
        %436 = vmatpush1.bf16.msra.mxu0 0
        %437 = vmatprep.subr.bf16.mxu0 0
        %438 = vmatpush1.bf16.msra.mxu0 0
        %439 = vmatprep.subr.bf16.mxu0 0
        %440 = vmatpush1.bf16.msra.mxu0 0
        %441 = vmatprep.mubr.bf16.mxu0 0
        %442 = vmatmul.mubr.bf16.gmra.mrb[0].mxu0 %v210
        %v443 = vpop.f32.mrb[0].mxu0
        %v444 = vadd.f32 %v247, %v443
        %v445 = vpop.f32.mrb[0].mxu0
        %v446 = vadd.f32 %v247, %v445
        %v447 = vpop.f32.mrb[0].mxu0
        %v448 = vpop.f32.mrb[0].mxu0
        %449 = vdwg.mxu0
        %450 = vmatprep.subr.bf16.mxu0 %v348
        %451 = vmatpush1.bf16.msra.mxu0 %v347
        %452 = vmatprep.subr.bf16.mxu0 %v352
        %453 = vmatpush1.bf16.msra.mxu0 %v351
        %454 = vmatprep.subr.bf16.mxu0 %v356
        %455 = vmatpush1.bf16.msra.mxu0 %v355
        %456 = vmatprep.subr.bf16.mxu0 %v360
        %457 = vmatpush1.bf16.msra.mxu0 %v359
        %458 = vmatprep.subr.bf16.mxu0 %v364
        %459 = vmatpush1.bf16.msra.mxu0 %v363
        %460 = vmatprep.subr.bf16.mxu0 %v368
        %461 = vmatpush1.bf16.msra.mxu0 %v367
        %462 = vmatprep.subr.bf16.mxu0 %v372
        %463 = vmatpush1.bf16.msra.mxu0 %v371
        %464 = vmatprep.subr.bf16.mxu0 %v376
        %465 = vmatpush1.bf16.msra.mxu0 %v375
        %466 = vmatprep.subr.bf16.mxu0 0
        %467 = vmatpush1.bf16.msra.mxu0 0
        %468 = vmatprep.subr.bf16.mxu0 0
        %469 = vmatpush1.bf16.msra.mxu0 0
        %470 = vmatprep.subr.bf16.mxu0 0
        %471 = vmatpush1.bf16.msra.mxu0 0
        %472 = vmatprep.subr.bf16.mxu0 0
        %473 = vmatpush1.bf16.msra.mxu0 0
        %474 = vmatprep.subr.bf16.mxu0 0
        %475 = vmatpush1.bf16.msra.mxu0 0
        %476 = vmatprep.subr.bf16.mxu0 0
        %477 = vmatpush1.bf16.msra.mxu0 0
        %478 = vmatprep.subr.bf16.mxu0 0
        %479 = vmatpush1.bf16.msra.mxu0 0
        %480 = vmatprep.subr.bf16.mxu0 0
        %481 = vmatpush1.bf16.msra.mxu0 0
        %482 = vmatprep.mubr.bf16.mxu0 0
        %483 = vmatmul.mubr.bf16.gmra.mrb[0].mxu0 %v210
        %v484 = vpop.f32.mrb[0].mxu0
        %v485 = vadd.f32 %v247, %v484
        %v486 = vpop.f32.mrb[0].mxu0
        %v487 = vadd.f32 %v247, %v486
        %v488 = vpop.f32.mrb[0].mxu0
        %v489 = vpop.f32.mrb[0].mxu0
        %490 = vdwg.mxu0
        %491 = vst [vmem:[%s206] sm:$0xff] %v444
        %492 = vst [vmem:[%s206 + $0x8] sm:$0xff] %v446
        %493 = vst [vmem:[%s206 + $0x10] sm:$0xff] %v485
        %494 = vst [vmem:[%s206 + $0x18] sm:$0xff] %v487
        %s495 = sand.u32 %s112, 1
        %s496 = scalar_lea.sflag [#allocation4], %s495
        %s497 = sand.u32 %s112, 1
        %s498 = smul.addr %s497, 32
        %s499 = scalar_lea.vmem [#allocation5], %s498
        // Predicated region
        $region37: #{tpu_custom_call.1} parent=31 // pred_check
          %p500 = pneg %p122
        $region38: #{tpu_custom_call.1} parent=31 // pred_check_branch
          %502 = sbr.rel (%p500) target = $region40
        $region39: #{tpu_custom_call.1} parent=31 // pred_region
          %s503 = smul.u32 4, %s25
          %s505 = ssub.s32 512, 512
          %506 = vsyncadd %s496, %s505
          %s507 = smul.addr %s24, 4
          %s508 = sadd.s32 %s503, %s507
          %s509 = smul.addr %s508, 128
          %s510 = scalar_lea.hbm %s3, %s509
          %s512 = sshll.u32 %s499, 4
          %s513 = int_to_ptr.vmem [resolvable:$true] %s512
          %515 = dma.vmem_to_hbm [thread:$0]  %s513, 512, %s510, %s496
        $region40: #{tpu_custom_call.1} parent=31 // pred_fallthru
          _
      $region32: #{tpu_custom_call.1} parent=5 // pred_fallthru
        _
      %p516 = scmp.le.s32.totalorder 2, %s15
      // Predicated region
      $region41: #{tpu_custom_call.1} parent=5 // pred_check
        %p517 = pneg %p516
      $region42: #{tpu_custom_call.1} parent=5 // pred_check_branch
        %519 = sbr.rel (%p517) target = $region44
      $region43: #{tpu_custom_call.1} parent=5 // pred_region
        %s520 = ssub.s32 %s15, 2
        // Predicated region
        $region45: #{tpu_custom_call.1} parent=43 // pred_check
          %p521 = pneg %p128
        $region46: #{tpu_custom_call.1} parent=43 // pred_check_branch
          %523 = sbr.rel (%p521) target = $region48
        $region47: #{tpu_custom_call.1} parent=43 // pred_region
          %s524 = sand.u32 %s113, 1
          %s525 = scalar_lea.sflag [#allocation4], %s524
          %s526 = sand.u32 %s113, 1
          %s527 = smul.addr %s526, 32
          %s528 = scalar_lea.vmem [#allocation5], %s527
          %529 = dma.done %s525, 512
        $region48: #{tpu_custom_call.1} parent=43 // pred_fallthru
          _
      $region44: #{tpu_custom_call.1} parent=5 // pred_fallthru
        _
    $region6: #{tpu_custom_call.1} parent=1 // loop_footer
      %s19 = sadd.s32 1, %s15
    $region7: #{tpu_custom_call.1} parent=1 // loop_footer_branch
      %14 = sbr.rel target = $region3
    $region8: #{tpu_custom_call.1} parent=1 // loop_exit
      _
    %530 = vsyncpa [#allocation3], 1
    %s531 = scalar_lea.sflag [#allocation3], 1
    %532 = vsyncpa %s531, 1
    %533 = vsyncpa [#allocation4], 1
    %s534 = scalar_lea.sflag [#allocation4], 1
    %535 = vsyncpa %s534, 1

</llo_original>
